<compile_context>
chip_gen: v7x
topology: tpu7x:2x2x1
jax: 0.10.0
libtpu: 0.0.40
codegen_flags: <defaults>
</compile_context>

<pallas_src>
import functools

import jax
import jax.numpy as jnp
from jax.experimental import pallas as pl
from jax.experimental.pallas import tpu as pltpu


def _round_up(x, m):
    return (x + m - 1) // m * m


def hybrid_kernel(pooled_ref, w1_ref, b1_ref, wcat_ref, bcat_ref,
                  logits_ref, qloss_ref, *, latent_dim, num_classes, c_pad):
    """Fused forward on one batch tile:
         h       = relu(pooled @ W1 + b1)              Autoencoder Linear(64,512)+ReLU
         out_cat = h @ [W2@Wo | W2_pad] + [b2@Wo+bo | b2_pad]   (single MXU pass)
         logits  = out_cat[:, :num_classes]            output_layer
         z       = out_cat[:, c_pad:]                  latent (padded to 128 lanes)
         qloss   = mean(cos(z[:, :latent]))            surrogate quantum expectation
    """
    pooled = pooled_ref[...]                                          # (BM, H) bf16

    h = jnp.dot(pooled, w1_ref[...],
                preferred_element_type=jnp.float32) + b1_ref[...]     # (BM, AE) f32
    h = jnp.maximum(h, 0.0)                                           # ReLU in f32
    h_bf = h.astype(jnp.bfloat16)

    # One fused contraction for logits-path and latent-path (N = c_pad + 128).
    out_cat = jnp.dot(h_bf, wcat_ref[...],
                      preferred_element_type=jnp.float32) + bcat_ref[...]

    logits_ref[...] = out_cat[:, :num_classes]                        # (BM, C) f32

    # Latent path only feeds the quantum-loss surrogate.
    # TODO(synk): VQEQuantumLayer (parameterized quantum circuit expectation value)
    # has no Pallas equivalent; classical surrogate = per-sample mean of cos(latent).
    z = out_cat[:, c_pad:]                                            # (BM, 128) f32
    lane = jax.lax.broadcasted_iota(jnp.int32, z.shape, dimension=1)
    cosz = jnp.where(lane < latent_dim, jnp.cos(z), 0.0)
    qloss_ref[...] = jnp.sum(cosz, axis=-1, keepdims=True) * (1.0 / latent_dim)


def prepare_params(params):
    """One-time parameter prep (do NOT call per forward step).

    Fuses the logits path (W2 @ Wo, b2 @ Wo + bo) so the kernel never contracts
    over latent=10, pads latent to a 128-lane tile for the z path, concatenates
    the two second-stage weights column-wise so the kernel does a single matmul,
    and casts MXU operands to bf16.
    """
    emb_table, w1, b1, w2, b2, wo, bo = params
    ae_hidden = w1.shape[1]
    latent = w2.shape[1]
    num_classes = wo.shape[1]
    assert latent <= 128, "latent_dim > 128 would be silently truncated"

    LPAD = 128
    c_pad = _round_up(num_classes, 128)

    wf = w2 @ wo                                                   # (AE, C)  f32
    bf = b2 @ wo + bo                                              # (1, C)   f32

    w_cat = jnp.zeros((ae_hidden, c_pad + LPAD), jnp.float32)
    w_cat = w_cat.at[:, :num_classes].set(wf)
    w_cat = w_cat.at[:, c_pad:c_pad + latent].set(w2)
    b_cat = jnp.zeros((1, c_pad + LPAD), jnp.float32)
    b_cat = b_cat.at[:, :num_classes].set(bf)
    b_cat = b_cat.at[:, c_pad:c_pad + latent].set(b2)

    return {
        "emb_table": emb_table,
        "w1": w1.astype(jnp.bfloat16),
        "b1": b1.astype(jnp.float32),
        "w_cat": w_cat.astype(jnp.bfloat16),
        "b_cat": b_cat.astype(jnp.float32),
        "latent": int(latent),
        "num_classes": int(num_classes),
        "c_pad": int(c_pad),
    }


def _pick_batch_tile(B):
    """Tile heuristic: big tiles (512/1024) for large B, >= 2 grid steps once
    B >= 16 so both v7x TensorCores are used, sublane-rounded tiny tiles else."""
    if B >= 16:
        target = 1024 if B >= 2048 else 512
        return min(target, _round_up((B + 1) // 2, 8))
    return _round_up(max(B, 1), 8)


def hybrid_forward(input_ids, attention_mask, prepped):
    """Glue (embedding gather, mean pool, batch padding) in plain JAX; dense
    compute in the Pallas kernel.

    Note: the original module's `encoder` is a full BERT transformer; here it is
    replaced by a deterministic embedding-table lookup producing (B, S, H).
    `attention_mask` is accepted for API parity but — matching the reference
    `.last_hidden_state.mean(dim=1)` — pooling is an unweighted mean over seq.
    """
    # TODO(synk): full BERT transformer encoder not implemented; surrogate = embedding lookup.
    del attention_mask
    emb_table = prepped["emb_table"]
    w1, b1 = prepped["w1"], prepped["b1"]
    w_cat, b_cat = prepped["w_cat"], prepped["b_cat"]
    latent = prepped["latent"]
    num_classes = prepped["num_classes"]
    c_pad = prepped["c_pad"]

    tok = jnp.take(emb_table, input_ids, axis=0).astype(jnp.float32)   # (B, S, H)
    pooled = jnp.mean(tok, axis=1)                                     # (B, H) f32

    B, H = pooled.shape
    ae_hidden = w1.shape[1]
    n_cat = w_cat.shape[1]                                             # c_pad + 128

    BM = _pick_batch_tile(B)
    B_pad = _round_up(B, BM)
    pooled_bf = jnp.pad(pooled.astype(jnp.bfloat16), ((0, B_pad - B), (0, 0)))

    grid = (B_pad // BM,)

    flops = 2 * B_pad * (H * ae_hidden + ae_hidden * n_cat)
    bytes_accessed = (B_pad * H * 2                     # pooled (bf16)
                      + H * ae_hidden * 2               # W1 (bf16)
                      + ae_hidden * 4                   # b1 (f32)
                      + ae_hidden * n_cat * 2           # W_cat (bf16)
                      + n_cat * 4                       # b_cat (f32)
                      + B_pad * num_classes * 4         # logits out
                      + B_pad * 4)                      # qloss out
    cost = pl.CostEstimate(flops=flops,
                           transcendentals=B_pad * 128,
                           bytes_accessed=bytes_accessed)

    logits_p, qloss_p = pl.pallas_call(
        functools.partial(hybrid_kernel, latent_dim=latent,
                          num_classes=num_classes, c_pad=c_pad),
        out_shape=(jax.ShapeDtypeStruct((B_pad, num_classes), jnp.float32),
                   jax.ShapeDtypeStruct((B_pad, 1), jnp.float32)),
        grid=grid,
        in_specs=[
            pl.BlockSpec((BM, H), lambda i: (i, 0)),            # pooled tile advances
            pl.BlockSpec((H, ae_hidden), lambda i: (0, 0)),     # weights stay resident
            pl.BlockSpec((1, ae_hidden), lambda i: (0, 0)),
            pl.BlockSpec((ae_hidden, n_cat), lambda i: (0, 0)),
            pl.BlockSpec((1, n_cat), lambda i: (0, 0)),
        ],
        out_specs=(
            pl.BlockSpec((BM, num_classes), lambda i: (i, 0)),
            pl.BlockSpec((BM, 1), lambda i: (i, 0)),
        ),
        compiler_params=pltpu.CompilerParams(
            dimension_semantics=("parallel",),
            vmem_limit_bytes=32 * 1024 * 1024),
        cost_estimate=cost,
    )(pooled_bf, w1, b1, w_cat, b_cat)

    logits = logits_p[:B]
    quantum_loss = qloss_p[:B]
    return logits, quantum_loss


def init_params(key, vocab_size, hidden_dim, ae_hidden, latent_dim, num_classes):
    """Deterministic synthetic parameters (PyTorch-Linear-style uniform init)."""
    keys = jax.random.split(key, 7)

    def lin(kw, kb, fan_in, fan_out):
        bound = 1.0 / jnp.sqrt(fan_in)
        w = jax.random.uniform(kw, (fan_in, fan_out), jnp.float32, -bound, bound)
        b = jax.random.uniform(kb, (1, fan_out), jnp.float32, -bound, bound)
        return w, b

    emb_table = jax.random.normal(keys[0], (vocab_size, hidden_dim), jnp.float32) * 0.02
    w1, b1 = lin(keys[1], keys[2], hidden_dim, ae_hidden)     # Linear(64, 512)
    w2, b2 = lin(keys[3], keys[4], ae_hidden, latent_dim)     # Linear(512, latent_dim=10)
    wo, bo = lin(keys[5], keys[6], latent_dim, num_classes)   # Linear(latent_dim, num_classes)
    return (emb_table, w1, b1, w2, b2, wo, bo)


if __name__ == "__main__":
    # Small shapes consistent with the module:
    #   input_dim (encoder hidden) = 64, ae hidden = 512, latent_dim = 10,
    #   small synthetic vocab/num_classes = 256, batch = 2, seq = 8.
    B, S = 2, 8
    HIDDEN = 64
    AE_HIDDEN = 512
    LATENT = 10
    NUM_CLASSES = 256

    key = jax.random.PRNGKey(0)
    k_ids, k_params = jax.random.split(key)

    input_ids = jax.random.randint(k_ids, (B, S), 0, NUM_CLASSES, dtype=jnp.int32)
    attention_mask = jnp.ones((B, S), dtype=jnp.int32)

    params = init_params(k_params, NUM_CLASSES, HIDDEN, AE_HIDDEN, LATENT, NUM_CLASSES)
    prepped = prepare_params(params)           # one-time parameter prep, not per step
    jax.block_until_ready(prepped["w_cat"])

    logits, quantum_loss = hybrid_forward(input_ids, attention_mask, prepped)
    jax.block_until_ready((logits, quantum_loss))

    assert logits.shape == (B, NUM_CLASSES) and logits.dtype == jnp.float32
    assert quantum_loss.shape == (B, 1) and quantum_loss.dtype == jnp.float32
    assert bool(jnp.all(jnp.isfinite(logits))) and bool(jnp.all(jnp.isfinite(quantum_loss)))
    print("KERNEL_OK")
</pallas_src>

<mosaic_0001>
module attributes {stable_mosaic.version = 11 : i64} {
  func.func @hybrid_kernel(%arg0: i32, %arg1: memref<8x64xbf16, #tpu.memory_space<vmem>>, %arg2: memref<64x512xbf16, #tpu.memory_space<vmem>>, %arg3: memref<1x512xf32, #tpu.memory_space<vmem>>, %arg4: memref<512x384xbf16, #tpu.memory_space<vmem>>, %arg5: memref<1x384xf32, #tpu.memory_space<vmem>>, %arg6: memref<8x256xf32, #tpu.memory_space<vmem>>, %arg7: memref<8x1xf32, #tpu.memory_space<vmem>>) attributes {dimension_semantics = [#tpu.dimension_semantics<parallel>], iteration_bounds = array<i64: 1>, scalar_prefetch = 0 : i64, scratch_operands = 0 : i64, tpu.core_type = #tpu.core_type<tc>, window_params = [{transform_indices = @transform_0, window_bounds = array<i64: 8, 64>}, {pipeline_mode = #tpu.pipeline_mode<synchronous>, transform_indices = @transform_1, window_bounds = array<i64: 64, 512>}, {pipeline_mode = #tpu.pipeline_mode<synchronous>, transform_indices = @transform_2, window_bounds = array<i64: 1, 512>}, {pipeline_mode = #tpu.pipeline_mode<synchronous>, transform_indices = @transform_3, window_bounds = array<i64: 512, 384>}, {pipeline_mode = #tpu.pipeline_mode<synchronous>, transform_indices = @transform_4, window_bounds = array<i64: 1, 384>}, {transform_indices = @transform_5, window_bounds = array<i64: 8, 256>}, {transform_indices = @transform_6, window_bounds = array<i64: 8, 1>}]} {
    %c0 = arith.constant 0 : index
    %c0_0 = arith.constant 0 : index
    %0 = vector.load %arg1[%c0, %c0_0] : memref<8x64xbf16, #tpu.memory_space<vmem>>, vector<8x64xbf16>
    %c0_1 = arith.constant 0 : index
    %c0_2 = arith.constant 0 : index
    %1 = vector.load %arg2[%c0_1, %c0_2] : memref<64x512xbf16, #tpu.memory_space<vmem>>, vector<64x512xbf16>
    %cst = arith.constant dense<0.000000e+00> : vector<8x512xf32>
    %2 = tpu.matmul %0, %1, %cst {dimension_numbers = #tpu.dot_dimension_numbers<[1], [0], [0], [1], [0, 0, 1, 1], [], []>} : vector<8x64xbf16>, vector<64x512xbf16>, vector<8x512xf32> -> vector<8x512xf32>
    %c0_3 = arith.constant 0 : index
    %c0_4 = arith.constant 0 : index
    %3 = vector.load %arg3[%c0_3, %c0_4] : memref<1x512xf32, #tpu.memory_space<vmem>>, vector<1x512xf32>
    %4 = vector.broadcast %3 : vector<1x512xf32> to vector<8x512xf32>
    %5 = arith.addf %2, %4 : vector<8x512xf32>
    %cst_5 = arith.constant 0.000000e+00 : f32
    %6 = vector.broadcast %cst_5 : f32 to vector<8x512xf32>
    %7 = arith.maximumf %5, %6 : vector<8x512xf32>
    %8 = arith.truncf %7 : vector<8x512xf32> to vector<8x512xbf16>
    %c0_6 = arith.constant 0 : index
    %c0_7 = arith.constant 0 : index
    %9 = vector.load %arg4[%c0_6, %c0_7] : memref<512x384xbf16, #tpu.memory_space<vmem>>, vector<512x384xbf16>
    %cst_8 = arith.constant dense<0.000000e+00> : vector<8x384xf32>
    %10 = tpu.matmul %8, %9, %cst_8 {dimension_numbers = #tpu.dot_dimension_numbers<[1], [0], [0], [1], [0, 0, 1, 1], [], []>} : vector<8x512xbf16>, vector<512x384xbf16>, vector<8x384xf32> -> vector<8x384xf32>
    %c0_9 = arith.constant 0 : index
    %c0_10 = arith.constant 0 : index
    %11 = vector.load %arg5[%c0_9, %c0_10] : memref<1x384xf32, #tpu.memory_space<vmem>>, vector<1x384xf32>
    %12 = vector.broadcast %11 : vector<1x384xf32> to vector<8x384xf32>
    %13 = arith.addf %10, %12 : vector<8x384xf32>
    %14 = vector.extract_strided_slice %13 {offsets = [0, 0], sizes = [8, 256], strides = [1, 1]} : vector<8x384xf32> to vector<8x256xf32>
    %c0_11 = arith.constant 0 : index
    %c0_12 = arith.constant 0 : index
    %15 = vector.load %arg6[%c0_11, %c0_12] : memref<8x256xf32, #tpu.memory_space<vmem>>, vector<8x256xf32>
    tpu.vector_store %arg6[%c0_11, %c0_12], %14 {strides = array<i32>} : memref<8x256xf32, #tpu.memory_space<vmem>>, vector<8x256xf32>,
    %16 = vector.extract_strided_slice %13 {offsets = [0, 256], sizes = [8, 128], strides = [1, 1]} : vector<8x384xf32> to vector<8x128xf32>
    %17 = tpu.iota {dimensions = array<i32: 1>} : vector<8x128xi32>
    %c10_i32 = arith.constant 10 : i32
    %18 = vector.broadcast %c10_i32 : i32 to vector<8x128xi32>
    %19 = arith.cmpi slt, %17, %18 : vector<8x128xi32>
    %20 = math.cos %16 : vector<8x128xf32>
    %cst_13 = arith.constant 0.000000e+00 : f32
    %21 = vector.broadcast %cst_13 : f32 to vector<8x128xf32>
    %22 = arith.select %19, %20, %21 : vector<8x128xi1>, vector<8x128xf32>
    %cst_14 = arith.constant dense<0.000000e+00> : vector<8xf32>
    %23 = vector.multi_reduction <add>, %22, %cst_14 [1] : vector<8x128xf32> to vector<8xf32>
    %24 = vector.shape_cast %23 : vector<8xf32> to vector<8x1xf32>
    %cst_15 = arith.constant 1.000000e-01 : f32
    %25 = vector.broadcast %cst_15 : f32 to vector<8x1xf32>
    %26 = arith.mulf %24, %25 : vector<8x1xf32>
    %c0_16 = arith.constant 0 : index
    %c0_17 = arith.constant 0 : index
    %27 = vector.load %arg7[%c0_16, %c0_17] : memref<8x1xf32, #tpu.memory_space<vmem>>, vector<8x1xf32>
    tpu.vector_store %arg7[%c0_16, %c0_17], %26 {strides = array<i32>} : memref<8x1xf32, #tpu.memory_space<vmem>>, vector<8x1xf32>,
    return
  }
  func.func @transform_0(%arg0: i32) -> (i32, i32) {
    %c0_i32 = arith.constant 0 : i32
    %c0_i32_0 = arith.constant 0 : i32
    return %arg0, %c0_i32 : i32, i32
  }
  func.func @transform_1(%arg0: i32) -> (i32, i32) {
    %c0_i32 = arith.constant 0 : i32
    %c0_i32_0 = arith.constant 0 : i32
    %c0_i32_1 = arith.constant 0 : i32
    return %c0_i32, %c0_i32_0 : i32, i32
  }
  func.func @transform_2(%arg0: i32) -> (i32, i32) {
    %c0_i32 = arith.constant 0 : i32
    %c0_i32_0 = arith.constant 0 : i32
    %c0_i32_1 = arith.constant 0 : i32
    return %c0_i32, %c0_i32_0 : i32, i32
  }
  func.func @transform_3(%arg0: i32) -> (i32, i32) {
    %c0_i32 = arith.constant 0 : i32
    %c0_i32_0 = arith.constant 0 : i32
    %c0_i32_1 = arith.constant 0 : i32
    return %c0_i32, %c0_i32_0 : i32, i32
  }
  func.func @transform_4(%arg0: i32) -> (i32, i32) {
    %c0_i32 = arith.constant 0 : i32
    %c0_i32_0 = arith.constant 0 : i32
    %c0_i32_1 = arith.constant 0 : i32
    return %c0_i32, %c0_i32_0 : i32, i32
  }
  func.func @transform_5(%arg0: i32) -> (i32, i32) {
    %c0_i32 = arith.constant 0 : i32
    %c0_i32_0 = arith.constant 0 : i32
    return %arg0, %c0_i32 : i32, i32
  }
  func.func @transform_6(%arg0: i32) -> (i32, i32) {
    %c0_i32 = arith.constant 0 : i32
    %c0_i32_0 = arith.constant 0 : i32
    return %arg0, %c0_i32 : i32, i32
  }
}

</mosaic_0001>

<llo_original>
// kernel: tpu_custom_call.1
$region0: #{tpu_custom_call.1}
  #allocation0 [shape = 'u32[]', space=smem, size = 0x4, offset = 0x4, fixed_abs, tag = 'smem constant byte address 0x4 - core index']
  #allocation1 [shape = 'u32[144,128]{1,0:T(1,128)}', space=vmem, size = 0x12000, scoped, tag = 'internal scratch']
  %s0 = inlined_call_operand.hbm [shape: bf16[8,64], index: 0, kind: input, shape index: {}]
  %s1 = inlined_call_operand.hbm [shape: bf16[64,512], index: 1, kind: input, shape index: {}]
  %s2 = inlined_call_operand.vmem [shape: f32[1,512], index: 2, kind: input, shape index: {}]
  %s3 = inlined_call_operand.hbm [shape: bf16[512,384], index: 3, kind: input, shape index: {}]
  %s4 = inlined_call_operand.vmem [shape: f32[1,384], index: 4, kind: input, shape index: {}]
  %s5 = inlined_call_operand.hbm [shape: f32[8,256], index: 5, kind: output, shape index: {0}]
  %s6 = inlined_call_operand.vmem [shape: f32[8,1], index: 6, kind: output, shape index: {1}]
  %7 = xla_tuple %s5, %s6
  %s8 = sld [smem:[#allocation0]]
  $region50: #{tpu_custom_call.1} parent=0
    _
  %s10 = ssub.s32 1, %s8
  %s11 = scalar_select 0, %s10, %s8
  $region1: #{tpu_custom_call.1} parent=0
    #allocation2 [shape = 'u8[2048]{0}', space=vmem, size = 0x800, scoped, tag = 'input window, operand 0, single buffered']
    #allocation3 [shape = 's32[1]{0}', space=sflag, size = 0x4, scoped, tag = 'scoped memory for tpu_custom_call.1']
    #allocation4 [shape = 's32[1]{0}', space=sflag, size = 0x4, scoped, tag = 'scoped memory for tpu_custom_call.1']
    #allocation5 [shape = 'u8[65536]{0}', space=vmem, size = 0x10000, scoped, tag = 'input window, operand 1, single buffered']
    #allocation6 [shape = 's32[1]{0}', space=sflag, size = 0x4, scoped, tag = 'scoped memory for tpu_custom_call.1']
    #allocation7 [shape = 'u8[393216]{0}', space=vmem, size = 0x60000, scoped, tag = 'input window, operand 3, single buffered']
    #allocation8 [shape = 'u8[8192]{0}', space=vmem, size = 0x2000, scoped, tag = 'output window, operand 0, single buffered']
    %12 = vsyncpa [#allocation3], 0
    %13 = vsyncpa [#allocation6], 0
    %14 = vsyncpa [#allocation4], 0
    // Predicated region
    $region2: #{tpu_custom_call.1} parent=1 // pred_check
      _
    $region3: #{tpu_custom_call.1} parent=1 // pred_check_branch
      %16 = sbr.rel (0) target = $region5
    $region4: #{tpu_custom_call.1} parent=1 // pred_region
      %s18 = ssub.s32 64, 64
      %19 = vsyncadd [#allocation3], %s18
      %s21 = sshll.u32 [#allocation2], 4
      %s22 = int_to_ptr.vmem [resolvable:$true] %s21
      %24 = dma.hbm_to_vmem [thread:$0]  %s0, 64, %s22, [#allocation3]
    $region5: #{tpu_custom_call.1} parent=1 // pred_fallthru
      _
    // Predicated region
    $region6: #{tpu_custom_call.1} parent=1 // pred_check
      _
    $region7: #{tpu_custom_call.1} parent=1 // pred_check_branch
      %26 = sbr.rel (0) target = $region9
    $region8: #{tpu_custom_call.1} parent=1 // pred_region
      %s28 = ssub.s32 2048, 2048
      %29 = vsyncadd [#allocation6], %s28
      %s30 = sshll.u32 [#allocation5], 4
      %s31 = int_to_ptr.vmem [resolvable:$true] %s30
      %36 = dma.hbm_to_vmem [thread:$0]  %s1, 2048, %s31, [#allocation6], 256, 256, 16
    $region9: #{tpu_custom_call.1} parent=1 // pred_fallthru
      _
    // Predicated region
    $region10: #{tpu_custom_call.1} parent=1 // pred_check
      _
    $region11: #{tpu_custom_call.1} parent=1 // pred_check_branch
      %38 = sbr.rel (0) target = $region13
    $region12: #{tpu_custom_call.1} parent=1 // pred_region
      _
    $region13: #{tpu_custom_call.1} parent=1 // pred_fallthru
      _
    // Predicated region
    $region14: #{tpu_custom_call.1} parent=1 // pred_check
      _
    $region15: #{tpu_custom_call.1} parent=1 // pred_check_branch
      %40 = sbr.rel (0) target = $region17
    $region16: #{tpu_custom_call.1} parent=1 // pred_region
      %s42 = ssub.s32 12288, 12288
      %43 = vsyncadd [#allocation6], %s42
      %s44 = sshll.u32 [#allocation7], 4
      %s45 = int_to_ptr.vmem [resolvable:$true] %s44
      %50 = dma.hbm_to_vmem [thread:$0]  %s3, 12288, %s45, [#allocation6], 192, 192, 12
    $region17: #{tpu_custom_call.1} parent=1 // pred_fallthru
      _
    // Predicated region
    $region18: #{tpu_custom_call.1} parent=1 // pred_check
      _
    $region19: #{tpu_custom_call.1} parent=1 // pred_check_branch
      %52 = sbr.rel (0) target = $region21
    $region20: #{tpu_custom_call.1} parent=1 // pred_region
      _
    $region21: #{tpu_custom_call.1} parent=1 // pred_fallthru
      _
    // Predicated region
    $region22: #{tpu_custom_call.1} parent=1 // pred_check
      _
    $region23: #{tpu_custom_call.1} parent=1 // pred_check_branch
      %54 = sbr.rel (0) target = $region25
    $region24: #{tpu_custom_call.1} parent=1 // pred_region
      %55 = dma.done [#allocation3], 64
    $region25: #{tpu_custom_call.1} parent=1 // pred_fallthru
      _
    // Predicated region
    $region26: #{tpu_custom_call.1} parent=1 // pred_check
      _
    $region27: #{tpu_custom_call.1} parent=1 // pred_check_branch
      %57 = sbr.rel (0) target = $region29
    $region28: #{tpu_custom_call.1} parent=1 // pred_region
      %58 = dma.done [#allocation6], 2048
    $region29: #{tpu_custom_call.1} parent=1 // pred_fallthru
      _
    // Predicated region
    $region30: #{tpu_custom_call.1} parent=1 // pred_check
      _
    $region31: #{tpu_custom_call.1} parent=1 // pred_check_branch
      %60 = sbr.rel (0) target = $region33
    $region32: #{tpu_custom_call.1} parent=1 // pred_region
      %61 = dma.done [#allocation6], 12288
    $region33: #{tpu_custom_call.1} parent=1 // pred_fallthru
      _
    %v63 = vld [vmem:[#allocation2] sm:$0xf]
    %v64 = vld [vmem:[#allocation5] sm:$0xff]
    %v65 = vld [vmem:[#allocation5 + $0x8] sm:$0xff]
    %v66 = vld [vmem:[#allocation5 + $0x10] sm:$0xff]
    %v67 = vld [vmem:[#allocation5 + $0x18] sm:$0xff]
    %v68 = vld [vmem:[#allocation5 + $0x20] sm:$0xff]
    %v69 = vld [vmem:[#allocation5 + $0x28] sm:$0xff]
    %v70 = vld [vmem:[#allocation5 + $0x30] sm:$0xff]
    %v71 = vld [vmem:[#allocation5 + $0x38] sm:$0xff]
    %v72 = vld [vmem:[#allocation5 + $0x40] sm:$0xff]
    %v73 = vld [vmem:[#allocation5 + $0x48] sm:$0xff]
    %v74 = vld [vmem:[#allocation5 + $0x50] sm:$0xff]
    %v75 = vld [vmem:[#allocation5 + $0x58] sm:$0xff]
    %v76 = vld [vmem:[#allocation5 + $0x60] sm:$0xff]
    %v77 = vld [vmem:[#allocation5 + $0x68] sm:$0xff]
    %v78 = vld [vmem:[#allocation5 + $0x70] sm:$0xff]
    %v79 = vld [vmem:[#allocation5 + $0x78] sm:$0xff]
    %v80 = vld [vmem:[%s2] sm:$0xf]
    %v82 = vlaneseq
    %v83 = vshrl.u32 %v82, 7
    %v84 = vsub.s32 0, %v83
    %v85 = vrot.slane %v80, %v84
    %v86 = vlaneseq
    %v87 = vshrl.u32 %v86, 7
    %v88 = vsub.s32 1, %v87
    %v89 = vrot.slane %v80, %v88
    %v90 = vlaneseq
    %v91 = vshrl.u32 %v90, 7
    %v92 = vsub.s32 2, %v91
    %v93 = vrot.slane %v80, %v92
    %v94 = vlaneseq
    %v95 = vshrl.u32 %v94, 7
    %v96 = vsub.s32 3, %v95
    %v97 = vrot.slane %v80, %v96
    %v118 = vunpack.c.l.b16 %v64
    %v119 = vunpack.c.h.b16 %v64
    %v120 = vunpack.c.l.b16 %v65
    %v121 = vunpack.c.h.b16 %v65
    %v122 = vunpack.c.l.b16 %v66
    %v123 = vunpack.c.h.b16 %v66
    %v124 = vunpack.c.l.b16 %v67
    %v125 = vunpack.c.h.b16 %v67
    %v126 = vunpack.c.l.b16 %v68
    %v127 = vunpack.c.h.b16 %v68
    %v128 = vunpack.c.l.b16 %v69
    %v129 = vunpack.c.h.b16 %v69
    %v130 = vunpack.c.l.b16 %v70
    %v131 = vunpack.c.h.b16 %v70
    %v132 = vunpack.c.l.b16 %v71
    %v133 = vunpack.c.h.b16 %v71
    %v134 = vunpack.c.l.b16 %v72
    %v135 = vunpack.c.h.b16 %v72
    %v136 = vunpack.c.l.b16 %v73
    %v137 = vunpack.c.h.b16 %v73
    %v138 = vunpack.c.l.b16 %v74
    %v139 = vunpack.c.h.b16 %v74
    %v140 = vunpack.c.l.b16 %v75
    %v141 = vunpack.c.h.b16 %v75
    %v142 = vunpack.c.l.b16 %v76
    %v143 = vunpack.c.h.b16 %v76
    %v144 = vunpack.c.l.b16 %v77
    %v145 = vunpack.c.h.b16 %v77
    %v146 = vunpack.c.l.b16 %v78
    %v147 = vunpack.c.h.b16 %v78
    %v148 = vunpack.c.l.b16 %v79
    %v149 = vunpack.c.h.b16 %v79
    %v150 = vpack.c.b16 %v122, %v118
    %v151 = vpack.c.b16 %v123, %v119
    %v152 = vpack.c.b16 %v124, %v120
    %v153 = vpack.c.b16 %v125, %v121
    %v154 = vpack.c.b16 %v130, %v126
    %v155 = vpack.c.b16 %v131, %v127
    %v156 = vpack.c.b16 %v132, %v128
    %v157 = vpack.c.b16 %v133, %v129
    %v158 = vpack.c.b16 %v138, %v134
    %v159 = vpack.c.b16 %v139, %v135
    %v160 = vpack.c.b16 %v140, %v136
    %v161 = vpack.c.b16 %v141, %v137
    %v162 = vpack.c.b16 %v146, %v142
    %v163 = vpack.c.b16 %v147, %v143
    %v164 = vpack.c.b16 %v148, %v144
    %v165 = vpack.c.b16 %v149, %v145
    %vm182 = vcmask 523264
    %v184 = vsel %vm182, %v63, 0
    %186 = vmatprep.subr.bf16.mxu0 %v151
    %187 = vmatpush1.bf16.msra.mxu0 %v150
    %188 = vmatprep.subr.bf16.mxu0 %v155
    %189 = vmatpush1.bf16.msra.mxu0 %v154
    %190 = vmatprep.subr.bf16.mxu0 %v159
    %191 = vmatpush1.bf16.msra.mxu0 %v158
    %192 = vmatprep.subr.bf16.mxu0 %v163
    %193 = vmatpush1.bf16.msra.mxu0 %v162
    %194 = vmatprep.subr.bf16.mxu0 0
    %195 = vmatpush1.bf16.msra.mxu0 0
    %196 = vmatprep.subr.bf16.mxu0 0
    %197 = vmatpush1.bf16.msra.mxu0 0
    %198 = vmatprep.subr.bf16.mxu0 0
    %199 = vmatpush1.bf16.msra.mxu0 0
    %200 = vmatprep.subr.bf16.mxu0 0
    %201 = vmatpush1.bf16.msra.mxu0 0
    %202 = vmatprep.subr.bf16.mxu0 0
    %203 = vmatpush1.bf16.msra.mxu0 0
    %204 = vmatprep.subr.bf16.mxu0 0
    %205 = vmatpush1.bf16.msra.mxu0 0
    %206 = vmatprep.subr.bf16.mxu0 0
    %207 = vmatpush1.bf16.msra.mxu0 0
    %208 = vmatprep.subr.bf16.mxu0 0
    %209 = vmatpush1.bf16.msra.mxu0 0
    %210 = vmatprep.subr.bf16.mxu0 0
    %211 = vmatpush1.bf16.msra.mxu0 0
    %212 = vmatprep.subr.bf16.mxu0 0
    %213 = vmatpush1.bf16.msra.mxu0 0
    %214 = vmatprep.subr.bf16.mxu0 0
    %215 = vmatpush1.bf16.msra.mxu0 0
    %216 = vmatprep.subr.bf16.mxu0 0
    %217 = vmatpush1.bf16.msra.mxu0 0
    %218 = vmatprep.mubr.bf16.mxu0 0
    %219 = vmatmul.mubr.bf16.gmra.mrb[0].mxu0 %v184
    %v220 = vpop.f32.mrb[0].mxu0
    %v221 = vadd.f32 %v85, %v220
    %v222 = vpop.f32.mrb[0].mxu0
    %v223 = vadd.f32 %v89, %v222
    %v224 = vpop.f32.mrb[0].mxu0
    %v225 = vpop.f32.mrb[0].mxu0
    %226 = vdwg.mxu0
    %227 = vmatprep.subr.bf16.mxu0 %v153
    %228 = vmatpush1.bf16.msra.mxu0 %v152
    %229 = vmatprep.subr.bf16.mxu0 %v157
    %230 = vmatpush1.bf16.msra.mxu0 %v156
    %231 = vmatprep.subr.bf16.mxu0 %v161
    %232 = vmatpush1.bf16.msra.mxu0 %v160
    %233 = vmatprep.subr.bf16.mxu0 %v165
    %234 = vmatpush1.bf16.msra.mxu0 %v164
    %235 = vmatprep.subr.bf16.mxu0 0
    %236 = vmatpush1.bf16.msra.mxu0 0
    %237 = vmatprep.subr.bf16.mxu0 0
    %238 = vmatpush1.bf16.msra.mxu0 0
    %239 = vmatprep.subr.bf16.mxu0 0
    %240 = vmatpush1.bf16.msra.mxu0 0
    %241 = vmatprep.subr.bf16.mxu0 0
    %242 = vmatpush1.bf16.msra.mxu0 0
    %243 = vmatprep.subr.bf16.mxu0 0
    %244 = vmatpush1.bf16.msra.mxu0 0
    %245 = vmatprep.subr.bf16.mxu0 0
    %246 = vmatpush1.bf16.msra.mxu0 0
    %247 = vmatprep.subr.bf16.mxu0 0
    %248 = vmatpush1.bf16.msra.mxu0 0
    %249 = vmatprep.subr.bf16.mxu0 0
    %250 = vmatpush1.bf16.msra.mxu0 0
    %251 = vmatprep.subr.bf16.mxu0 0
    %252 = vmatpush1.bf16.msra.mxu0 0
    %253 = vmatprep.subr.bf16.mxu0 0
    %254 = vmatpush1.bf16.msra.mxu0 0
    %255 = vmatprep.subr.bf16.mxu0 0
    %256 = vmatpush1.bf16.msra.mxu0 0
    %257 = vmatprep.subr.bf16.mxu0 0
    %258 = vmatpush1.bf16.msra.mxu0 0
    %259 = vmatprep.mubr.bf16.mxu0 0
    %260 = vmatmul.mubr.bf16.gmra.mrb[0].mxu0 %v184
    %v261 = vpop.f32.mrb[0].mxu0
    %v262 = vadd.f32 %v93, %v261
    %v263 = vpop.f32.mrb[0].mxu0
    %v264 = vadd.f32 %v97, %v263
    %v265 = vpop.f32.mrb[0].mxu0
    %v266 = vpop.f32.mrb[0].mxu0
    %267 = vdwg.mxu0
    %v268 = vmax.f32 %v221, 0.0
    %v269 = vmax.f32 %v223, 0.0
    %v270 = vmax.f32 %v262, 0.0
    %v271 = vmax.f32 %v264, 0.0
    %v272 = vpack.c.bf16 %v268, %v268
    %v273 = vpack.c.bf16 %v269, %v269
    %v274 = vpack.c.bf16 %v270, %v270
    %v275 = vpack.c.bf16 %v271, %v271
    %v276 = vld [vmem:[#allocation7] sm:$0xff]
    %v277 = vld [vmem:[#allocation7 + $0x8] sm:$0xf]
    %v278 = vld [vmem:[#allocation7 + $0xc] sm:$0xff]
    %v279 = vld [vmem:[#allocation7 + $0x14] sm:$0xf]
    %v280 = vld [vmem:[#allocation7 + $0x18] sm:$0xff]
    %v281 = vld [vmem:[#allocation7 + $0x20] sm:$0xf]
    %v282 = vld [vmem:[#allocation7 + $0x24] sm:$0xff]
    %v283 = vld [vmem:[#allocation7 + $0x2c] sm:$0xf]
    %v284 = vld [vmem:[#allocation7 + $0x30] sm:$0xff]
    %v285 = vld [vmem:[#allocation7 + $0x38] sm:$0xf]
    %v286 = vld [vmem:[#allocation7 + $0x3c] sm:$0xff]
    %v287 = vld [vmem:[#allocation7 + $0x44] sm:$0xf]
    %v288 = vld [vmem:[#allocation7 + $0x48] sm:$0xff]
    %v289 = vld [vmem:[#allocation7 + $0x50] sm:$0xf]
    %v290 = vld [vmem:[#allocation7 + $0x54] sm:$0xff]
    %v291 = vld [vmem:[#allocation7 + $0x5c] sm:$0xf]
    %v292 = vld [vmem:[#allocation7 + $0x60] sm:$0xff]
    %v293 = vld [vmem:[#allocation7 + $0x68] sm:$0xf]
    %v294 = vld [vmem:[#allocation7 + $0x6c] sm:$0xff]
    %v295 = vld [vmem:[#allocation7 + $0x74] sm:$0xf]
    %v296 = vld [vmem:[#allocation7 + $0x78] sm:$0xff]
    %v297 = vld [vmem:[#allocation7 + $0x80] sm:$0xf]
    %v298 = vld [vmem:[#allocation7 + $0x84] sm:$0xff]
    %v299 = vld [vmem:[#allocation7 + $0x8c] sm:$0xf]
    %v300 = vld [vmem:[#allocation7 + $0x90] sm:$0xff]
    %v301 = vld [vmem:[#allocation7 + $0x98] sm:$0xf]
    %v302 = vld [vmem:[#allocation7 + $0x9c] sm:$0xff]
    %v303 = vld [vmem:[#allocation7 + $0xa4] sm:$0xf]
    %v304 = vld [vmem:[#allocation7 + $0xa8] sm:$0xff]
    %v305 = vld [vmem:[#allocation7 + $0xb0] sm:$0xf]
    %v306 = vld [vmem:[#allocation7 + $0xb4] sm:$0xff]
    %v307 = vld [vmem:[#allocation7 + $0xbc] sm:$0xf]
    %v308 = vld [vmem:[#allocation7 + $0xc0] sm:$0xff]
    %v309 = vld [vmem:[#allocation7 + $0xc8] sm:$0xf]
    %v310 = vld [vmem:[#allocation7 + $0xcc] sm:$0xff]
    %v311 = vld [vmem:[#allocation7 + $0xd4] sm:$0xf]
    %v312 = vld [vmem:[#allocation7 + $0xd8] sm:$0xff]
    %v313 = vld [vmem:[#allocation7 + $0xe0] sm:$0xf]
    %v314 = vld [vmem:[#allocation7 + $0xe4] sm:$0xff]
    %v315 = vld [vmem:[#allocation7 + $0xec] sm:$0xf]
    %v316 = vld [vmem:[#allocation7 + $0xf0] sm:$0xff]
    %v317 = vld [vmem:[#allocation7 + $0xf8] sm:$0xf]
    %v318 = vld [vmem:[#allocation7 + $0xfc] sm:$0xff]
    %v319 = vld [vmem:[#allocation7 + $0x104] sm:$0xf]
    %v320 = vld [vmem:[#allocation7 + $0x108] sm:$0xff]
    %v321 = vld [vmem:[#allocation7 + $0x110] sm:$0xf]
    %v322 = vld [vmem:[#allocation7 + $0x114] sm:$0xff]
    %v323 = vld [vmem:[#allocation7 + $0x11c] sm:$0xf]
    %v324 = vld [vmem:[#allocation7 + $0x120] sm:$0xff]
    %v325 = vld [vmem:[#allocation7 + $0x128] sm:$0xf]
    %v326 = vld [vmem:[#allocation7 + $0x12c] sm:$0xff]
    %v327 = vld [vmem:[#allocation7 + $0x134] sm:$0xf]
    %v328 = vld [vmem:[#allocation7 + $0x138] sm:$0xff]
    %v329 = vld [vmem:[#allocation7 + $0x140] sm:$0xf]
    %v330 = vld [vmem:[#allocation7 + $0x144] sm:$0xff]
    %v331 = vld [vmem:[#allocation7 + $0x14c] sm:$0xf]
    %v332 = vld [vmem:[#allocation7 + $0x150] sm:$0xff]
    %v333 = vld [vmem:[#allocation7 + $0x158] sm:$0xf]
    %v334 = vld [vmem:[#allocation7 + $0x15c] sm:$0xff]
    %v335 = vld [vmem:[#allocation7 + $0x164] sm:$0xf]
    %v336 = vld [vmem:[#allocation7 + $0x168] sm:$0xff]
    %v337 = vld [vmem:[#allocation7 + $0x170] sm:$0xf]
    %v338 = vld [vmem:[#allocation7 + $0x174] sm:$0xff]
    %v339 = vld [vmem:[#allocation7 + $0x17c] sm:$0xf]
    %v340 = vld [vmem:[#allocation7 + $0x180] sm:$0xff]
    %v341 = vld [vmem:[#allocation7 + $0x188] sm:$0xf]
    %v342 = vld [vmem:[#allocation7 + $0x18c] sm:$0xff]
    %v343 = vld [vmem:[#allocation7 + $0x194] sm:$0xf]
    %v344 = vld [vmem:[#allocation7 + $0x198] sm:$0xff]
    %v345 = vld [vmem:[#allocation7 + $0x1a0] sm:$0xf]
    %v346 = vld [vmem:[#allocation7 + $0x1a4] sm:$0xff]
    %v347 = vld [vmem:[#allocation7 + $0x1ac] sm:$0xf]
    %v348 = vld [vmem:[#allocation7 + $0x1b0] sm:$0xff]
    %v349 = vld [vmem:[#allocation7 + $0x1b8] sm:$0xf]
    %v350 = vld [vmem:[#allocation7 + $0x1bc] sm:$0xff]
    %v351 = vld [vmem:[#allocation7 + $0x1c4] sm:$0xf]
    %v352 = vld [vmem:[#allocation7 + $0x1c8] sm:$0xff]
    %v353 = vld [vmem:[#allocation7 + $0x1d0] sm:$0xf]
    %v354 = vld [vmem:[#allocation7 + $0x1d4] sm:$0xff]
    %v355 = vld [vmem:[#allocation7 + $0x1dc] sm:$0xf]
    %v356 = vld [vmem:[#allocation7 + $0x1e0] sm:$0xff]
    %v357 = vld [vmem:[#allocation7 + $0x1e8] sm:$0xf]
    %v358 = vld [vmem:[#allocation7 + $0x1ec] sm:$0xff]
    %v359 = vld [vmem:[#allocation7 + $0x1f4] sm:$0xf]
    %v360 = vld [vmem:[#allocation7 + $0x1f8] sm:$0xff]
    %v361 = vld [vmem:[#allocation7 + $0x200] sm:$0xf]
    %v362 = vld [vmem:[#allocation7 + $0x204] sm:$0xff]
    %v363 = vld [vmem:[#allocation7 + $0x20c] sm:$0xf]
    %v364 = vld [vmem:[#allocation7 + $0x210] sm:$0xff]
    %v365 = vld [vmem:[#allocation7 + $0x218] sm:$0xf]
    %v366 = vld [vmem:[#allocation7 + $0x21c] sm:$0xff]
    %v367 = vld [vmem:[#allocation7 + $0x224] sm:$0xf]
    %v368 = vld [vmem:[#allocation7 + $0x228] sm:$0xff]
    %v369 = vld [vmem:[#allocation7 + $0x230] sm:$0xf]
    %v370 = vld [vmem:[#allocation7 + $0x234] sm:$0xff]
    %v371 = vld [vmem:[#allocation7 + $0x23c] sm:$0xf]
    %v372 = vld [vmem:[#allocation7 + $0x240] sm:$0xff]
    %v373 = vld [vmem:[#allocation7 + $0x248] sm:$0xf]
    %v374 = vld [vmem:[#allocation7 + $0x24c] sm:$0xff]
    %v375 = vld [vmem:[#allocation7 + $0x254] sm:$0xf]
    %v376 = vld [vmem:[#allocation7 + $0x258] sm:$0xff]
    %v377 = vld [vmem:[#allocation7 + $0x260] sm:$0xf]
    %v378 = vld [vmem:[#allocation7 + $0x264] sm:$0xff]
    %v379 = vld [vmem:[#allocation7 + $0x26c] sm:$0xf]
    %v380 = vld [vmem:[#allocation7 + $0x270] sm:$0xff]
    %v381 = vld [vmem:[#allocation7 + $0x278] sm:$0xf]
    %v382 = vld [vmem:[#allocation7 + $0x27c] sm:$0xff]
    %v383 = vld [vmem:[#allocation7 + $0x284] sm:$0xf]
    %v384 = vld [vmem:[#allocation7 + $0x288] sm:$0xff]
    %v385 = vld [vmem:[#allocation7 + $0x290] sm:$0xf]
    %v386 = vld [vmem:[#allocation7 + $0x294] sm:$0xff]
    %v387 = vld [vmem:[#allocation7 + $0x29c] sm:$0xf]
    %v388 = vld [vmem:[#allocation7 + $0x2a0] sm:$0xff]
    %v389 = vld [vmem:[#allocation7 + $0x2a8] sm:$0xf]
    %v390 = vld [vmem:[#allocation7 + $0x2ac] sm:$0xff]
    %v391 = vld [vmem:[#allocation7 + $0x2b4] sm:$0xf]
    %v392 = vld [vmem:[#allocation7 + $0x2b8] sm:$0xff]
    %v393 = vld [vmem:[#allocation7 + $0x2c0] sm:$0xf]
    %v394 = vld [vmem:[#allocation7 + $0x2c4] sm:$0xff]
    %v395 = vld [vmem:[#allocation7 + $0x2cc] sm:$0xf]
    %v396 = vld [vmem:[#allocation7 + $0x2d0] sm:$0xff]
    %v397 = vld [vmem:[#allocation7 + $0x2d8] sm:$0xf]
    %v398 = vld [vmem:[#allocation7 + $0x2dc] sm:$0xff]
    %v399 = vld [vmem:[#allocation7 + $0x2e4] sm:$0xf]
    %v400 = vld [vmem:[#allocation7 + $0x2e8] sm:$0xff]
    %v401 = vld [vmem:[#allocation7 + $0x2f0] sm:$0xf]
    %v402 = vld [vmem:[#allocation7 + $0x2f4] sm:$0xff]
    %v403 = vld [vmem:[#allocation7 + $0x2fc] sm:$0xf]
    %v404 = vld [vmem:[%s4] sm:$0x7]
    %v406 = vlaneseq
    %v407 = vshrl.u32 %v406, 7
    %v408 = vsub.s32 0, %v407
    %v409 = vrot.slane %v404, %v408
    %v410 = vlaneseq
    %v411 = vshrl.u32 %v410, 7
    %v412 = vsub.s32 1, %v411
    %v413 = vrot.slane %v404, %v412
    %v414 = vlaneseq
    %v415 = vshrl.u32 %v414, 7
    %v416 = vsub.s32 2, %v415
    %v417 = vrot.slane %v404, %v416
    %v549 = vunpack.c.l.b16 %v276
    %v550 = vunpack.c.h.b16 %v276
    %v551 = vunpack.c.l.b16 %v277
    %v552 = vunpack.c.l.b16 %v278
    %v553 = vunpack.c.h.b16 %v278
    %v554 = vunpack.c.l.b16 %v279
    %v555 = vunpack.c.l.b16 %v280
    %v556 = vunpack.c.h.b16 %v280
    %v557 = vunpack.c.l.b16 %v281
    %v558 = vunpack.c.l.b16 %v282
    %v559 = vunpack.c.h.b16 %v282
    %v560 = vunpack.c.l.b16 %v283
    %v561 = vunpack.c.l.b16 %v284
    %v562 = vunpack.c.h.b16 %v284
    %v563 = vunpack.c.l.b16 %v285
    %v564 = vunpack.c.l.b16 %v286
    %v565 = vunpack.c.h.b16 %v286
    %v566 = vunpack.c.l.b16 %v287
    %v567 = vunpack.c.l.b16 %v288
    %v568 = vunpack.c.h.b16 %v288
    %v569 = vunpack.c.l.b16 %v289
    %v570 = vunpack.c.l.b16 %v290
    %v571 = vunpack.c.h.b16 %v290
    %v572 = vunpack.c.l.b16 %v291
    %v573 = vunpack.c.l.b16 %v292
    %v574 = vunpack.c.h.b16 %v292
    %v575 = vunpack.c.l.b16 %v293
    %v576 = vunpack.c.l.b16 %v294
    %v577 = vunpack.c.h.b16 %v294
    %v578 = vunpack.c.l.b16 %v295
    %v579 = vunpack.c.l.b16 %v296
    %v580 = vunpack.c.h.b16 %v296
    %v581 = vunpack.c.l.b16 %v297
    %v582 = vunpack.c.l.b16 %v298
    %v583 = vunpack.c.h.b16 %v298
    %v584 = vunpack.c.l.b16 %v299
    %v585 = vunpack.c.l.b16 %v300
    %v586 = vunpack.c.h.b16 %v300
    %v587 = vunpack.c.l.b16 %v301
    %v588 = vunpack.c.l.b16 %v302
    %v589 = vunpack.c.h.b16 %v302
    %v590 = vunpack.c.l.b16 %v303
    %v591 = vunpack.c.l.b16 %v304
    %v592 = vunpack.c.h.b16 %v304
    %v593 = vunpack.c.l.b16 %v305
    %v594 = vunpack.c.l.b16 %v306
    %v595 = vunpack.c.h.b16 %v306
    %v596 = vunpack.c.l.b16 %v307
    %v597 = vunpack.c.l.b16 %v308
    %v598 = vunpack.c.h.b16 %v308
    %v599 = vunpack.c.l.b16 %v309
    %v600 = vunpack.c.l.b16 %v310
    %v601 = vunpack.c.h.b16 %v310
    %v602 = vunpack.c.l.b16 %v311
    %v603 = vunpack.c.l.b16 %v312
    %v604 = vunpack.c.h.b16 %v312
    %v605 = vunpack.c.l.b16 %v313
    %v606 = vunpack.c.l.b16 %v314
    %v607 = vunpack.c.h.b16 %v314
    %v608 = vunpack.c.l.b16 %v315
    %v609 = vunpack.c.l.b16 %v316
    %v610 = vunpack.c.h.b16 %v316
    %v611 = vunpack.c.l.b16 %v317
    %v612 = vunpack.c.l.b16 %v318
    %v613 = vunpack.c.h.b16 %v318
    %v614 = vunpack.c.l.b16 %v319
    %v615 = vunpack.c.l.b16 %v320
    %v616 = vunpack.c.h.b16 %v320
    %v617 = vunpack.c.l.b16 %v321
    %v618 = vunpack.c.l.b16 %v322
    %v619 = vunpack.c.h.b16 %v322
    %v620 = vunpack.c.l.b16 %v323
    %v621 = vunpack.c.l.b16 %v324
    %v622 = vunpack.c.h.b16 %v324
    %v623 = vunpack.c.l.b16 %v325
    %v624 = vunpack.c.l.b16 %v326
    %v625 = vunpack.c.h.b16 %v326
    %v626 = vunpack.c.l.b16 %v327
    %v627 = vunpack.c.l.b16 %v328
    %v628 = vunpack.c.h.b16 %v328
    %v629 = vunpack.c.l.b16 %v329
    %v630 = vunpack.c.l.b16 %v330
    %v631 = vunpack.c.h.b16 %v330
    %v632 = vunpack.c.l.b16 %v331
    %v633 = vunpack.c.l.b16 %v332
    %v634 = vunpack.c.h.b16 %v332
    %v635 = vunpack.c.l.b16 %v333
    %v636 = vunpack.c.l.b16 %v334
    %v637 = vunpack.c.h.b16 %v334
    %v638 = vunpack.c.l.b16 %v335
    %v639 = vunpack.c.l.b16 %v336
    %v640 = vunpack.c.h.b16 %v336
    %v641 = vunpack.c.l.b16 %v337
    %v642 = vunpack.c.l.b16 %v338
    %v643 = vunpack.c.h.b16 %v338
    %v644 = vunpack.c.l.b16 %v339
    %v645 = vunpack.c.l.b16 %v340
    %v646 = vunpack.c.h.b16 %v340
    %v647 = vunpack.c.l.b16 %v341
    %v648 = vunpack.c.l.b16 %v342
    %v649 = vunpack.c.h.b16 %v342
    %v650 = vunpack.c.l.b16 %v343
    %v651 = vunpack.c.l.b16 %v344
    %v652 = vunpack.c.h.b16 %v344
    %v653 = vunpack.c.l.b16 %v345
    %v654 = vunpack.c.l.b16 %v346
    %v655 = vunpack.c.h.b16 %v346
    %v656 = vunpack.c.l.b16 %v347
    %v657 = vunpack.c.l.b16 %v348
    %v658 = vunpack.c.h.b16 %v348
    %v659 = vunpack.c.l.b16 %v349
    %v660 = vunpack.c.l.b16 %v350
    %v661 = vunpack.c.h.b16 %v350
    %v662 = vunpack.c.l.b16 %v351
    %v663 = vunpack.c.l.b16 %v352
    %v664 = vunpack.c.h.b16 %v352
    %v665 = vunpack.c.l.b16 %v353
    %v666 = vunpack.c.l.b16 %v354
    %v667 = vunpack.c.h.b16 %v354
    %v668 = vunpack.c.l.b16 %v355
    %v669 = vunpack.c.l.b16 %v356
    %v670 = vunpack.c.h.b16 %v356
    %v671 = vunpack.c.l.b16 %v357
    %v672 = vunpack.c.l.b16 %v358
    %v673 = vunpack.c.h.b16 %v358
    %v674 = vunpack.c.l.b16 %v359
    %v675 = vunpack.c.l.b16 %v360
    %v676 = vunpack.c.h.b16 %v360
    %v677 = vunpack.c.l.b16 %v361
    %v678 = vunpack.c.l.b16 %v362
    %v679 = vunpack.c.h.b16 %v362
    %v680 = vunpack.c.l.b16 %v363
    %v681 = vunpack.c.l.b16 %v364
    %v682 = vunpack.c.h.b16 %v364
    %v683 = vunpack.c.l.b16 %v365
    %v684 = vunpack.c.l.b16 %v366
    %v685 = vunpack.c.h.b16 %v366
    %v686 = vunpack.c.l.b16 %v367
    %v687 = vunpack.c.l.b16 %v368
    %v688 = vunpack.c.h.b16 %v368
    %v689 = vunpack.c.l.b16 %v369
    %v690 = vunpack.c.l.b16 %v370
    %v691 = vunpack.c.h.b16 %v370
    %v692 = vunpack.c.l.b16 %v371
    %v693 = vunpack.c.l.b16 %v372
    %v694 = vunpack.c.h.b16 %v372
    %v695 = vunpack.c.l.b16 %v373
    %v696 = vunpack.c.l.b16 %v374
    %v697 = vunpack.c.h.b16 %v374
    %v698 = vunpack.c.l.b16 %v375
    %v699 = vunpack.c.l.b16 %v376
    %v700 = vunpack.c.h.b16 %v376
    %v701 = vunpack.c.l.b16 %v377
    %v702 = vunpack.c.l.b16 %v378
    %v703 = vunpack.c.h.b16 %v378
    %v704 = vunpack.c.l.b16 %v379
    %v705 = vunpack.c.l.b16 %v380
    %v706 = vunpack.c.h.b16 %v380
    %v707 = vunpack.c.l.b16 %v381
    %v708 = vunpack.c.l.b16 %v382
    %v709 = vunpack.c.h.b16 %v382
    %v710 = vunpack.c.l.b16 %v383
    %v711 = vunpack.c.l.b16 %v384
    %v712 = vunpack.c.h.b16 %v384
    %v713 = vunpack.c.l.b16 %v385
    %v714 = vunpack.c.l.b16 %v386
    %v715 = vunpack.c.h.b16 %v386
    %v716 = vunpack.c.l.b16 %v387
    %v717 = vunpack.c.l.b16 %v388
    %v718 = vunpack.c.h.b16 %v388
    %v719 = vunpack.c.l.b16 %v389
    %v720 = vunpack.c.l.b16 %v390
    %v721 = vunpack.c.h.b16 %v390
    %v722 = vunpack.c.l.b16 %v391
    %v723 = vunpack.c.l.b16 %v392
    %v724 = vunpack.c.h.b16 %v392
    %v725 = vunpack.c.l.b16 %v393
    %v726 = vunpack.c.l.b16 %v394
    %v727 = vunpack.c.h.b16 %v394
    %v728 = vunpack.c.l.b16 %v395
    %v729 = vunpack.c.l.b16 %v396
    %v730 = vunpack.c.h.b16 %v396
    %v731 = vunpack.c.l.b16 %v397
    %v732 = vunpack.c.l.b16 %v398
    %v733 = vunpack.c.h.b16 %v398
    %v734 = vunpack.c.l.b16 %v399
    %v735 = vunpack.c.l.b16 %v400
    %v736 = vunpack.c.h.b16 %v400
    %v737 = vunpack.c.l.b16 %v401
    %v738 = vunpack.c.l.b16 %v402
    %v739 = vunpack.c.h.b16 %v402
    %v740 = vunpack.c.l.b16 %v403
    %v741 = vpack.c.b16 %v552, %v549
    %v742 = vpack.c.b16 %v553, %v550
    %v743 = vpack.c.b16 %v554, %v551
    %v744 = vpack.c.b16 %v558, %v555
    %v745 = vpack.c.b16 %v559, %v556
    %v746 = vpack.c.b16 %v560, %v557
    %v747 = vpack.c.b16 %v564, %v561
    %v748 = vpack.c.b16 %v565, %v562
    %v749 = vpack.c.b16 %v566, %v563
    %v750 = vpack.c.b16 %v570, %v567
    %v751 = vpack.c.b16 %v571, %v568
    %v752 = vpack.c.b16 %v572, %v569
    %v753 = vpack.c.b16 %v576, %v573
    %v754 = vpack.c.b16 %v577, %v574
    %v755 = vpack.c.b16 %v578, %v575
    %v756 = vpack.c.b16 %v582, %v579
    %v757 = vpack.c.b16 %v583, %v580
    %v758 = vpack.c.b16 %v584, %v581
    %v759 = vpack.c.b16 %v588, %v585
    %v760 = vpack.c.b16 %v589, %v586
    %v761 = vpack.c.b16 %v590, %v587
    %v762 = vpack.c.b16 %v594, %v591
    %v763 = vpack.c.b16 %v595, %v592
    %v764 = vpack.c.b16 %v596, %v593
    %v765 = vpack.c.b16 %v600, %v597
    %v766 = vpack.c.b16 %v601, %v598
    %v767 = vpack.c.b16 %v602, %v599
    %v768 = vpack.c.b16 %v606, %v603
    %v769 = vpack.c.b16 %v607, %v604
    %v770 = vpack.c.b16 %v608, %v605
    %v771 = vpack.c.b16 %v612, %v609
    %v772 = vpack.c.b16 %v613, %v610
    %v773 = vpack.c.b16 %v614, %v611
    %v774 = vpack.c.b16 %v618, %v615
    %v775 = vpack.c.b16 %v619, %v616
    %v776 = vpack.c.b16 %v620, %v617
    %v777 = vpack.c.b16 %v624, %v621
    %v778 = vpack.c.b16 %v625, %v622
    %v779 = vpack.c.b16 %v626, %v623
    %v780 = vpack.c.b16 %v630, %v627
    %v781 = vpack.c.b16 %v631, %v628
    %v782 = vpack.c.b16 %v632, %v629
    %v783 = vpack.c.b16 %v636, %v633
    %v784 = vpack.c.b16 %v637, %v634
    %v785 = vpack.c.b16 %v638, %v635
    %v786 = vpack.c.b16 %v642, %v639
    %v787 = vpack.c.b16 %v643, %v640
    %v788 = vpack.c.b16 %v644, %v641
    %v789 = vpack.c.b16 %v648, %v645
    %v790 = vpack.c.b16 %v649, %v646
    %v791 = vpack.c.b16 %v650, %v647
    %v792 = vpack.c.b16 %v654, %v651
    %v793 = vpack.c.b16 %v655, %v652
    %v794 = vpack.c.b16 %v656, %v653
    %v795 = vpack.c.b16 %v660, %v657
    %v796 = vpack.c.b16 %v661, %v658
    %v797 = vpack.c.b16 %v662, %v659
    %v798 = vpack.c.b16 %v666, %v663
    %v799 = vpack.c.b16 %v667, %v664
    %v800 = vpack.c.b16 %v668, %v665
    %v801 = vpack.c.b16 %v672, %v669
    %v802 = vpack.c.b16 %v673, %v670
    %v803 = vpack.c.b16 %v674, %v671
    %v804 = vpack.c.b16 %v678, %v675
    %v805 = vpack.c.b16 %v679, %v676
    %v806 = vpack.c.b16 %v680, %v677
    %v807 = vpack.c.b16 %v684, %v681
    %v808 = vpack.c.b16 %v685, %v682
    %v809 = vpack.c.b16 %v686, %v683
    %v810 = vpack.c.b16 %v690, %v687
    %v811 = vpack.c.b16 %v691, %v688
    %v812 = vpack.c.b16 %v692, %v689
    %v813 = vpack.c.b16 %v696, %v693
    %v814 = vpack.c.b16 %v697, %v694
    %v815 = vpack.c.b16 %v698, %v695
    %v816 = vpack.c.b16 %v702, %v699
    %v817 = vpack.c.b16 %v703, %v700
    %v818 = vpack.c.b16 %v704, %v701
    %v819 = vpack.c.b16 %v708, %v705
    %v820 = vpack.c.b16 %v709, %v706
    %v821 = vpack.c.b16 %v710, %v707
    %v822 = vpack.c.b16 %v714, %v711
    %v823 = vpack.c.b16 %v715, %v712
    %v824 = vpack.c.b16 %v716, %v713
    %v825 = vpack.c.b16 %v720, %v717
    %v826 = vpack.c.b16 %v721, %v718
    %v827 = vpack.c.b16 %v722, %v719
    %v828 = vpack.c.b16 %v726, %v723
    %v829 = vpack.c.b16 %v727, %v724
    %v830 = vpack.c.b16 %v728, %v725
    %v831 = vpack.c.b16 %v732, %v729
    %v832 = vpack.c.b16 %v733, %v730
    %v833 = vpack.c.b16 %v734, %v731
    %v834 = vpack.c.b16 %v738, %v735
    %v835 = vpack.c.b16 %v739, %v736
    %v836 = vpack.c.b16 %v740, %v737
    %933 = vmatprep.subr.bf16.mxu0 %v742
    %934 = vmatpush1.bf16.msra.mxu0 %v741
    %935 = vmatprep.subr.bf16.mxu0 %v745
    %936 = vmatpush1.bf16.msra.mxu0 %v744
    %937 = vmatprep.subr.bf16.mxu0 %v748
    %938 = vmatpush1.bf16.msra.mxu0 %v747
    %939 = vmatprep.subr.bf16.mxu0 %v751
    %940 = vmatpush1.bf16.msra.mxu0 %v750
    %941 = vmatprep.subr.bf16.mxu0 %v754
    %942 = vmatpush1.bf16.msra.mxu0 %v753
    %943 = vmatprep.subr.bf16.mxu0 %v757
    %944 = vmatpush1.bf16.msra.mxu0 %v756
    %945 = vmatprep.subr.bf16.mxu0 %v760
    %946 = vmatpush1.bf16.msra.mxu0 %v759
    %947 = vmatprep.subr.bf16.mxu0 %v763
    %948 = vmatpush1.bf16.msra.mxu0 %v762
    %949 = vmatprep.subr.bf16.mxu0 %v766
    %950 = vmatpush1.bf16.msra.mxu0 %v765
    %951 = vmatprep.subr.bf16.mxu0 %v769
    %952 = vmatpush1.bf16.msra.mxu0 %v768
    %953 = vmatprep.subr.bf16.mxu0 %v772
    %954 = vmatpush1.bf16.msra.mxu0 %v771
    %955 = vmatprep.subr.bf16.mxu0 %v775
    %956 = vmatpush1.bf16.msra.mxu0 %v774
    %957 = vmatprep.subr.bf16.mxu0 %v778
    %958 = vmatpush1.bf16.msra.mxu0 %v777
    %959 = vmatprep.subr.bf16.mxu0 %v781
    %960 = vmatpush1.bf16.msra.mxu0 %v780
    %961 = vmatprep.subr.bf16.mxu0 %v784
    %962 = vmatpush1.bf16.msra.mxu0 %v783
    %963 = vmatprep.subr.bf16.mxu0 %v787
    %964 = vmatpush1.bf16.msra.mxu0 %v786
    %965 = vmatprep.mubr.bf16.mxu0 %v273
    %966 = vmatmul.mubr.bf16.gmra.mrb[0].mxu0 %v272
    %v967 = vpop.f32.mrb[0].mxu0
    %v968 = vadd.f32 %v409, %v967
    %v969 = vpop.f32.mrb[0].mxu0
    %v970 = vadd.f32 %v413, %v969
    %v971 = vpop.f32.mrb[0].mxu0
    %v972 = vpop.f32.mrb[0].mxu0
    %973 = vdwg.mxu0
    %974 = vmatprep.subr.bf16.mxu0 %v790
    %975 = vmatpush1.bf16.msra.mxu0 %v789
    %976 = vmatprep.subr.bf16.mxu0 %v793
    %977 = vmatpush1.bf16.msra.mxu0 %v792
    %978 = vmatprep.subr.bf16.mxu0 %v796
    %979 = vmatpush1.bf16.msra.mxu0 %v795
    %980 = vmatprep.subr.bf16.mxu0 %v799
    %981 = vmatpush1.bf16.msra.mxu0 %v798
    %982 = vmatprep.subr.bf16.mxu0 %v802
    %983 = vmatpush1.bf16.msra.mxu0 %v801
    %984 = vmatprep.subr.bf16.mxu0 %v805
    %985 = vmatpush1.bf16.msra.mxu0 %v804
    %986 = vmatprep.subr.bf16.mxu0 %v808
    %987 = vmatpush1.bf16.msra.mxu0 %v807
    %988 = vmatprep.subr.bf16.mxu0 %v811
    %989 = vmatpush1.bf16.msra.mxu0 %v810
    %990 = vmatprep.subr.bf16.mxu0 %v814
    %991 = vmatpush1.bf16.msra.mxu0 %v813
    %992 = vmatprep.subr.bf16.mxu0 %v817
    %993 = vmatpush1.bf16.msra.mxu0 %v816
    %994 = vmatprep.subr.bf16.mxu0 %v820
    %995 = vmatpush1.bf16.msra.mxu0 %v819
    %996 = vmatprep.subr.bf16.mxu0 %v823
    %997 = vmatpush1.bf16.msra.mxu0 %v822
    %998 = vmatprep.subr.bf16.mxu0 %v826
    %999 = vmatpush1.bf16.msra.mxu0 %v825
    %1000 = vmatprep.subr.bf16.mxu0 %v829
    %1001 = vmatpush1.bf16.msra.mxu0 %v828
    %1002 = vmatprep.subr.bf16.mxu0 %v832
    %1003 = vmatpush1.bf16.msra.mxu0 %v831
    %1004 = vmatprep.subr.bf16.mxu0 %v835
    %1005 = vmatpush1.bf16.msra.mxu0 %v834
    %1006 = vmatprep.mubr.bf16.mxu0 %v275
    %1007 = vmatmul.mubr.bf16.gmra.mrb[0].mxu0 %v274
    %v1008 = vpop.f32.mrb[0].mxu0
    %v1009 = vadd.f32 %v968, %v1008
    %v1010 = vpop.f32.mrb[0].mxu0
    %v1011 = vadd.f32 %v970, %v1010
    %v1012 = vpop.f32.mrb[0].mxu0
    %v1013 = vpop.f32.mrb[0].mxu0
    %1014 = vdwg.mxu0
    %1015 = vmatprep.subr.bf16.mxu0 0
    %1016 = vmatpush1.bf16.msra.mxu0 %v743
    %1017 = vmatprep.subr.bf16.mxu0 0
    %1018 = vmatpush1.bf16.msra.mxu0 %v746
    %1019 = vmatprep.subr.bf16.mxu0 0
    %1020 = vmatpush1.bf16.msra.mxu0 %v749
    %1021 = vmatprep.subr.bf16.mxu0 0
    %1022 = vmatpush1.bf16.msra.mxu0 %v752
    %1023 = vmatprep.subr.bf16.mxu0 0
    %1024 = vmatpush1.bf16.msra.mxu0 %v755
    %1025 = vmatprep.subr.bf16.mxu0 0
    %1026 = vmatpush1.bf16.msra.mxu0 %v758
    %1027 = vmatprep.subr.bf16.mxu0 0
    %1028 = vmatpush1.bf16.msra.mxu0 %v761
    %1029 = vmatprep.subr.bf16.mxu0 0
    %1030 = vmatpush1.bf16.msra.mxu0 %v764
    %1031 = vmatprep.subr.bf16.mxu0 0
    %1032 = vmatpush1.bf16.msra.mxu0 %v767
    %1033 = vmatprep.subr.bf16.mxu0 0
    %1034 = vmatpush1.bf16.msra.mxu0 %v770
    %1035 = vmatprep.subr.bf16.mxu0 0
    %1036 = vmatpush1.bf16.msra.mxu0 %v773
    %1037 = vmatprep.subr.bf16.mxu0 0
    %1038 = vmatpush1.bf16.msra.mxu0 %v776
    %1039 = vmatprep.subr.bf16.mxu0 0
    %1040 = vmatpush1.bf16.msra.mxu0 %v779
    %1041 = vmatprep.subr.bf16.mxu0 0
    %1042 = vmatpush1.bf16.msra.mxu0 %v782
    %1043 = vmatprep.subr.bf16.mxu0 0
    %1044 = vmatpush1.bf16.msra.mxu0 %v785
    %1045 = vmatprep.subr.bf16.mxu0 0
    %1046 = vmatpush1.bf16.msra.mxu0 %v788
    %1047 = vmatprep.mubr.bf16.mxu0 %v273
    %1048 = vmatmul.mubr.bf16.gmra.mrb[0].mxu0 %v272
    %v1049 = vpop.f32.mrb[0].mxu0
    %v1050 = vadd.f32 %v417, %v1049
    %v1051 = vpop.f32.mrb[0].mxu0
    %v1052 = vpop.f32.mrb[0].mxu0
    %v1053 = vpop.f32.mrb[0].mxu0
    %1054 = vdwg.mxu0
    %1055 = vmatprep.subr.bf16.mxu0 0
    %1056 = vmatpush1.bf16.msra.mxu0 %v791
    %1057 = vmatprep.subr.bf16.mxu0 0
    %1058 = vmatpush1.bf16.msra.mxu0 %v794
    %1059 = vmatprep.subr.bf16.mxu0 0
    %1060 = vmatpush1.bf16.msra.mxu0 %v797
    %1061 = vmatprep.subr.bf16.mxu0 0
    %1062 = vmatpush1.bf16.msra.mxu0 %v800
    %1063 = vmatprep.subr.bf16.mxu0 0
    %1064 = vmatpush1.bf16.msra.mxu0 %v803
    %1065 = vmatprep.subr.bf16.mxu0 0
    %1066 = vmatpush1.bf16.msra.mxu0 %v806
    %1067 = vmatprep.subr.bf16.mxu0 0
    %1068 = vmatpush1.bf16.msra.mxu0 %v809
    %1069 = vmatprep.subr.bf16.mxu0 0
    %1070 = vmatpush1.bf16.msra.mxu0 %v812
    %1071 = vmatprep.subr.bf16.mxu0 0
    %1072 = vmatpush1.bf16.msra.mxu0 %v815
    %1073 = vmatprep.subr.bf16.mxu0 0
    %1074 = vmatpush1.bf16.msra.mxu0 %v818
    %1075 = vmatprep.subr.bf16.mxu0 0
    %1076 = vmatpush1.bf16.msra.mxu0 %v821
    %1077 = vmatprep.subr.bf16.mxu0 0
    %1078 = vmatpush1.bf16.msra.mxu0 %v824
    %1079 = vmatprep.subr.bf16.mxu0 0
    %1080 = vmatpush1.bf16.msra.mxu0 %v827
    %1081 = vmatprep.subr.bf16.mxu0 0
    %1082 = vmatpush1.bf16.msra.mxu0 %v830
    %1083 = vmatprep.subr.bf16.mxu0 0
    %1084 = vmatpush1.bf16.msra.mxu0 %v833
    %1085 = vmatprep.subr.bf16.mxu0 0
    %1086 = vmatpush1.bf16.msra.mxu0 %v836
    %1087 = vmatprep.mubr.bf16.mxu0 %v275
    %1088 = vmatmul.mubr.bf16.gmra.mrb[0].mxu0 %v274
    %v1089 = vpop.f32.mrb[0].mxu0
    %v1090 = vadd.f32 %v1050, %v1089
    %v1091 = vpop.f32.mrb[0].mxu0
    %v1092 = vpop.f32.mrb[0].mxu0
    %v1093 = vpop.f32.mrb[0].mxu0
    %1094 = vdwg.mxu0
    %1095 = vst [vmem:[#allocation8] sm:$0xff] %v1009
    %1096 = vst [vmem:[#allocation8 + $0x8] sm:$0xff] %v1011
    %v1097 = vlaneseq
    %v1098 = vand.u32 %v1097, 127
    %vm1099 = vcmp.lt.s32.totalorder %v1098, 10
    %v1100 = vand.u32 2147483647, %v1090
    %vm1101 = vcmp.le.f32.partialorder %v1100, 0.7853982
    %vm1102 = vcmp.lt.s32.totalorder %v1090, 0
    %v1103 = vand.u32 %v1090, 2139095040
    %v1104 = vshrl.u32 %v1103, 23
    %v1105 = vsub.s32 %v1104, 127
    %v1106 = vand.u32 2147483647, %v1090
    %v1107 = vand.u32 %v1106, 8388607
    %v1108 = vor.u32 %v1107, 8388608
    %v1109 = vsub.s32 0, %v1108
    %v1110 = vadd.s32 %v1105, 1
    %vm1111 = vcmp.gt.s32.totalorder %v1110, 0
    %v1112 = vsel %vm1111, %v1110, 0
    %v1113 = vshrl.u32 %v1112, 5
    %v1114 = vand.u32 %v1112, 31
    %v1115 = vsub.s32 32, %v1114
    %v1116 = vshrl.u32 683565275, %v1115
    %v1117 = vshll.u32 683565275, %v1114
    %v1118 = vshrl.u32 2475754826, %v1115
    %v1119 = vor.u32 %v1117, %v1118
    %v1120 = vshll.u32 2475754826, %v1114
    %v1121 = vshrl.u32 2131351028, %v1115
    %v1122 = vor.u32 %v1120, %v1121
    %v1123 = vshll.u32 2131351028, %v1114
    %v1124 = vshrl.u32 2102212464, %v1115
    %v1125 = vor.u32 %v1123, %v1124
    %v1126 = vshll.u32 2102212464, %v1114
    %v1127 = vshrl.u32 920167782, %v1115
    %v1128 = vor.u32 %v1126, %v1127
    %v1129 = vshll.u32 920167782, %v1114
    %v1130 = vshrl.u32 1326507024, %v1115
    %v1131 = vor.u32 %v1129, %v1130
    %vm1132 = vcmp.lt.s32.totalorder %v1113, 1
    %vm1133 = vcmp.lt.s32.totalorder %v1113, 2
    %vm1134 = vcmp.lt.s32.totalorder %v1113, 3
    %vm1135 = vcmp.lt.s32.totalorder %v1113, 4
    %v1136 = vsel %vm1132, %v1116, %v1119
    %v1137 = vsel %vm1135, %v1125, 2102212464
    %v1138 = vsel %vm1134, %v1122, %v1137
    %v1139 = vsel %vm1133, %v1136, %v1138
    %v1140 = vsel %vm1132, %v1119, %v1122
    %v1141 = vsel %vm1135, %v1128, 920167782
    %v1142 = vsel %vm1134, %v1125, %v1141
    %v1143 = vsel %vm1133, %v1140, %v1142
    %v1144 = vsel %vm1132, %v1122, %v1125
    %v1145 = vsel %vm1135, %v1131, 1326507024
    %v1146 = vsel %vm1134, %v1128, %v1145
    %v1147 = vsel %vm1133, %v1144, %v1146
    %v1148 = vshll.u32 %v1108, 8
    %v1149 = vmul.u32.u64.compose %v1148, %v1147
    %v1150 = vextract.low.u32 %v1149
    %v1151 = vextract.high.u32 %v1149
    %v1152 = vmul.u32.u64.compose %v1148, %v1143
    %v1153 = vextract.low.u32 %v1152
    %v1154 = vextract.high.u32 %v1152
    %v1155 = vmul.u32 %v1148, %v1139
    %v1156 = vadd.s32 %v1151, %v1153
    %vm1157 = vc.u32 %v1151, %v1153
    %v1158 = vadd.s32 %v1154, 1
    %v1159 = vsel %vm1157, %v1158, %v1154
    %v1160 = vadd.s32 %v1155, %v1159
    %v1161 = vadd.s32 %v1160, 536870912
    %v1162 = vshrl.u32 %v1161, 30
    %v1163 = vshll.u32 %v1162, 30
    %v1164 = vsub.s32 %v1160, %v1163
    %vm1165 = vcmp.lt.s32.totalorder %v1164, 0
    %v1166 = vsub.s32 0, %v1164
    %v1167 = vsel %vm1165, %v1166, %v1164
    %v1168 = vclz %v1167
    %v1169 = vsub.s32 %v1168, 2
    %vm1170 = vcmp.gt.s32.totalorder 0, %v1169
    %v1171 = vsel %vm1170, 0, %v1169
    %v1172 = vsub.s32 32, %v1171
    %v1173 = vshll.u32 %v1164, %v1171
    %v1174 = vshrl.u32 %v1156, %v1172
    %v1175 = vor.u32 %v1173, %v1174
    %v1176 = vsub.s32 4294967266, %v1171
    %v1177 = vadd.s32 %v1176, 127
    %v1178 = vshll.u32 %v1177, 23
    %v1179 = vor.u32 4788187, %v1178
    %v1180 = vand.u32 2147483647, %v1179
    %v1182 = vcvt.s32.f32 %v1175
    %v1183 = vmul.f32 %v1182, %v1180
    %v1184 = vxor.u32 %v1183, 2147483648
    %v1185 = vsel %vm1102, %v1184, %v1183
    %v1186 = vsub.s32 4, %v1162
    %v1187 = vsel %vm1102, %v1186, %v1162
    %v1188 = vsel %vm1101, %v1090, %v1185
    %v1189 = vsel %vm1101, 0, %v1187
    %v1190 = vcosq.f32.pop %v1188
    %v1191 = vsinq.f32.pop %v1188
    %vm1192 = vweird.f32 %v1090
    %v1193 = vand.u32 %v1189, 3
    %vm1194 = vcmp.lt.s32.totalorder %v1193, 2
    %vm1195 = vcmp.eq.s32.totalorder %v1193, 0
    %v1196 = vxor.u32 %v1191, 2147483648
    %v1197 = vsel %vm1195, %v1190, %v1196
    %vm1198 = vcmp.eq.s32.totalorder %v1193, 2
    %v1199 = vxor.u32 %v1190, 2147483648
    %v1200 = vsel %vm1198, %v1199, %v1191
    %v1201 = vsel %vm1194, %v1197, %v1200
    %v1202 = vsel %vm1192, nan, %v1201
    %v1203 = vsel %vm1099, %v1202, 0.0
    %1204 = vadd.xlane.f32.xlu0 %v1203
    %v1205 = vpop.xlane.xlu0 %1204
    %v1206 = vmul.f32 %v1205, 0.1
    %vm1207 = vcmask 7168
    %1208 = vst.msk [vmem:[%s6] sm:$0xff] %vm1207, %v1206
    // Predicated region
    $region34: #{tpu_custom_call.1} parent=1 // pred_check
      _
    $region35: #{tpu_custom_call.1} parent=1 // pred_check_branch
      %1210 = sbr.rel (0) target = $region37
    $region36: #{tpu_custom_call.1} parent=1 // pred_region
      %s1212 = ssub.s32 256, 256
      %1213 = vsyncadd [#allocation4], %s1212
      %s1215 = sshll.u32 [#allocation8], 4
      %s1216 = int_to_ptr.vmem [resolvable:$true] %s1215
      %1218 = dma.vmem_to_hbm [thread:$0]  %s1216, 256, %s5, [#allocation4]
    $region37: #{tpu_custom_call.1} parent=1 // pred_fallthru
      _
    // Predicated region
    $region38: #{tpu_custom_call.1} parent=1 // pred_check
      _
    $region39: #{tpu_custom_call.1} parent=1 // pred_check_branch
      %1220 = sbr.rel (0) target = $region41
    $region40: #{tpu_custom_call.1} parent=1 // pred_region
      _
    $region41: #{tpu_custom_call.1} parent=1 // pred_fallthru
      _
    // Predicated region
    $region42: #{tpu_custom_call.1} parent=1 // pred_check
      _
    $region43: #{tpu_custom_call.1} parent=1 // pred_check_branch
      %1222 = sbr.rel (0) target = $region45
    $region44: #{tpu_custom_call.1} parent=1 // pred_region
      %1223 = dma.done [#allocation4], 256
    $region45: #{tpu_custom_call.1} parent=1 // pred_fallthru
      _
    // Predicated region
    $region46: #{tpu_custom_call.1} parent=1 // pred_check
      _
    $region47: #{tpu_custom_call.1} parent=1 // pred_check_branch
      %1225 = sbr.rel (0) target = $region49
    $region48: #{tpu_custom_call.1} parent=1 // pred_region
      _
    $region49: #{tpu_custom_call.1} parent=1 // pred_fallthru
      _
    %1226 = vsyncpa [#allocation3], 1
    %1227 = vsyncpa [#allocation6], 1
    %1228 = vsyncpa [#allocation4], 1

</llo_original>
